<compile_context>
chip_gen: v5e
topology: v5e:2x2
jax: 0.10.0
libtpu: 0.0.40
codegen_flags: <defaults>
</compile_context>

<pallas_src>
import numpy as np
import jax
import jax.numpy as jnp
from jax.experimental import pallas as pl
from jax.experimental.pallas import tpu as pltpu


_WEIGHT_DTYPE = jnp.bfloat16              # halves HBM traffic vs f32
_LANE = 128                               # TPU lane width (last-dim tiling unit)
_WEIGHT_VMEM_BUDGET = 24 * 1024 * 1024    # delta matrix x 2 pipeline buffers


def _consistency_kernel(nbr_lab_ref, node_lab_ref, base_ref, delta_ref,
                        out_ref):
    """One (TR, TN) delta tile.

    score[j] = base[j] + sum_i [label_i == label_j] * delta[i, j]

    Per-node (per-column) scores are accumulated into the resident (1, TN)
    output block across row (reduction) tiles; the block is seeded with the
    label-independent base term at the first reduction step.
    """
    r = pl.program_id(1)                              # reduction step (row tiles)

    @pl.when(r == 0)
    def _init():
        out_ref[...] = base_ref[...]

    same = nbr_lab_ref[...] == node_lab_ref[...]      # (TR,1)==(1,TN) -> (TR,TN)
    delta = delta_ref[...].astype(jnp.float32)        # bf16 -> f32 (free VPU slack)
    contrib = jnp.where(same, delta, 0.0)             # (TR, TN) f32
    out_ref[...] += jnp.sum(contrib, axis=0, keepdims=True)   # (1, TN) f32


def _pick_tiles(n_pad, weight_itemsize):
    """Largest lane-multiple tiles dividing n_pad that keep the double-buffered
    delta working set (2 buffers x TR x TN) under the budget."""
    def largest_div(cap):
        best, t = _LANE, _LANE
        cap = min(cap, n_pad)
        while t <= cap:
            if n_pad % t == 0:
                best = t
            t += _LANE
        return best

    tn = largest_div(2048)                                        # lane / output tile
    tr_cap = max(_LANE, _WEIGHT_VMEM_BUDGET // (2 * tn * weight_itemsize))
    tr = largest_div(tr_cap)                                      # reduction tile
    return tr, tn


def _consistency_scores(labels, base, delta_w):
    """labels: int32 [n_pad]; base: float32 [1, n_pad]; delta_w: bf16 [n_pad, n_pad]
    -> float32 [n_pad] per-node (per-column) scores."""
    n_pad = labels.shape[0]
    itemsize = jnp.dtype(delta_w.dtype).itemsize
    tr, tn = _pick_tiles(n_pad, itemsize)
    grid = (n_pad // tn, n_pad // tr)     # (parallel cols, reduction rows last)

    nbr_lab = labels.reshape(n_pad, 1)    # row-node labels (column vector)
    node_lab = labels.reshape(1, n_pad)   # scored-node labels (lane-dense row)

    # double-buffered delta tiles + slack; explicit so v5e's 16 MiB default
    # doesn't cap the pipeline, and still well under v7x's 64 MiB physical.
    vmem_limit = int(max(32 * 2**20, 2 * tr * tn * itemsize + 8 * 2**20))

    out = pl.pallas_call(
        _consistency_kernel,
        out_shape=jax.ShapeDtypeStruct((1, n_pad), jnp.float32),
        grid=grid,
        in_specs=[
            pl.BlockSpec((tr, 1), lambda j, r: (r, 0)),    # neighbor-row labels
            pl.BlockSpec((1, tn), lambda j, r: (0, j)),    # scored-column labels
            pl.BlockSpec((1, tn), lambda j, r: (0, j)),    # label-independent base
            pl.BlockSpec((tr, tn), lambda j, r: (r, j)),   # delta = agree - disagree
        ],
        out_specs=pl.BlockSpec((1, tn), lambda j, r: (0, j)),
        compiler_params=pltpu.CompilerParams(
            dimension_semantics=("parallel", "arbitrary"),
            vmem_limit_bytes=vmem_limit),
    )(nbr_lab, node_lab, base, delta_w)
    return out[0]


class ConsistencyScoring:
    """JAX/Pallas counterpart of pytorch_gleam.inference.ConsistencyScoring."""
    # TODO(synk): the PyTorch base class is abstract (no forward body); the
    # concrete edge-agreement scoring above is one reasonable instantiation.

    def forward(self, adj_list, node_labels):
        # --- glue: build node index and dense delta/base arrays -------------
        node_idx = {}
        for name in node_labels:
            node_idx.setdefault(name, len(node_idx))
        for a, b, _ in adj_list:
            node_idx.setdefault(a, len(node_idx))
            node_idx.setdefault(b, len(node_idx))
        n = len(node_idx)
        if n == 0:
            return np.zeros((0,), dtype=np.float32), node_idx

        # pad to a lane multiple (128) so tiled BlockSpecs are unmasked
        n_pad = max(_LANE, int(np.ceil(n / _LANE)) * _LANE)

        labels = np.empty((n_pad,), dtype=np.int32)
        # padded (and unlabeled) nodes get unique negative labels so they
        # never spuriously "agree" with anything
        for i in range(n_pad):
            labels[i] = -2 - i
        for name, lab in node_labels.items():
            labels[node_idx[name]] = int(lab)

        # delta[i, j] = agree[i, j] - disagree[i, j] contributed to node j
        # (the scored column) by neighbor i (the reduced row);
        # base[j] = sum_i disagree[i, j] (the label-independent part).
        delta_w = np.zeros((n_pad, n_pad), dtype=np.float32)
        base = np.zeros((1, n_pad), dtype=np.float32)
        for a, b, (aw, dw) in adj_list:
            ia, ib = node_idx[a], node_idx[b]
            aw = float(aw)
            dw = float(dw)
            d = aw - dw
            delta_w[ib, ia] += d
            delta_w[ia, ib] += d
            base[0, ia] += dw
            base[0, ib] += dw

        # --- hot path: Pallas kernel ---------------------------------------
        scores = _consistency_scores(
            jnp.asarray(labels),
            jnp.asarray(base),
            jnp.asarray(delta_w, dtype=_WEIGHT_DTYPE))
        scores = jax.block_until_ready(scores)
        return np.asarray(scores)[:n], node_idx

    __call__ = forward


if __name__ == "__main__":
    key = jax.random.PRNGKey(0)
    n_nodes = 10
    names = [f"n{i}" for i in range(n_nodes)]

    k1, k2 = jax.random.split(key, 2)
    labs = jax.random.randint(k1, (n_nodes,), 0, 3)
    node_labels = {names[i]: int(labs[i]) for i in range(n_nodes)}

    # ring + a few chords, with deterministic random (agree, disagree) weights.
    # Weights are multiples of 1/32 so they (and their differences / small sums)
    # are exactly representable in the kernel's bf16 delta storage.
    edges = [(i, (i + 1) % n_nodes) for i in range(n_nodes)] + [(0, 5), (2, 7), (3, 8)]
    w_int = np.asarray(jax.random.randint(k2, (len(edges), 2), 0, 32))
    w = w_int.astype(np.float32) / 32.0

    adj_list = [
        (names[a], names[b], (float(w[e, 0]), float(w[e, 1])))
        for e, (a, b) in enumerate(edges)
    ]

    scorer = ConsistencyScoring()
    scores, node_idx = scorer.forward(adj_list, node_labels)

    # pure-Python reference check
    ref = np.zeros((n_nodes,), dtype=np.float32)
    for a, b, (aw, dw) in adj_list:
        s = aw if node_labels[a] == node_labels[b] else dw
        ref[node_idx[a]] += s
        ref[node_idx[b]] += s
    assert scores.shape == (n_nodes,)
    assert np.allclose(scores, ref, rtol=1e-5, atol=1e-5), (scores, ref)

    print("KERNEL_OK")
</pallas_src>

<mosaic_0001>
module attributes {stable_mosaic.version = 11 : i64} {
  func.func @_consistency_kernel(%arg0: i32, %arg1: i32, %arg2: memref<128x1xi32, #tpu.memory_space<vmem>>, %arg3: memref<1x128xi32, #tpu.memory_space<vmem>>, %arg4: memref<1x128xf32, #tpu.memory_space<vmem>>, %arg5: memref<128x128xbf16, #tpu.memory_space<vmem>>, %arg6: memref<1x128xf32, #tpu.memory_space<vmem>>) attributes {dimension_semantics = [#tpu.dimension_semantics<parallel>, #tpu.dimension_semantics<arbitrary>], iteration_bounds = array<i64: 1, 1>, scalar_prefetch = 0 : i64, scratch_operands = 0 : i64, tpu.core_type = #tpu.core_type<tc>, window_params = [{transform_indices = @transform_0, window_bounds = array<i64: 128, 1>}, {transform_indices = @transform_1, window_bounds = array<i64: 1, 128>}, {transform_indices = @transform_2, window_bounds = array<i64: 1, 128>}, {transform_indices = @transform_3, window_bounds = array<i64: 128, 128>}, {transform_indices = @transform_4, window_bounds = array<i64: 1, 128>}]} {
    %c0_i32 = arith.constant 0 : i32
    %0 = arith.cmpi eq, %arg1, %c0_i32 : i32
    %1 = arith.extui %0 : i1 to i32
    %c0_i32_0 = arith.constant 0 : i32
    %2 = arith.cmpi ne, %1, %c0_i32_0 : i32
    scf.if %2 {
      %c0_11 = arith.constant 0 : index
      %c0_12 = arith.constant 0 : index
      %17 = vector.load %arg4[%c0_11, %c0_12] : memref<1x128xf32, #tpu.memory_space<vmem>>, vector<1x128xf32>
      %c0_13 = arith.constant 0 : index
      %c0_14 = arith.constant 0 : index
      %18 = vector.load %arg6[%c0_13, %c0_14] : memref<1x128xf32, #tpu.memory_space<vmem>>, vector<1x128xf32>
      tpu.vector_store %arg6[%c0_13, %c0_14], %17 {strides = array<i32>} : memref<1x128xf32, #tpu.memory_space<vmem>>, vector<1x128xf32>,
    } else {
    }
    %c0 = arith.constant 0 : index
    %c0_1 = arith.constant 0 : index
    %3 = vector.load %arg2[%c0, %c0_1] : memref<128x1xi32, #tpu.memory_space<vmem>>, vector<128x1xi32>
    %c0_2 = arith.constant 0 : index
    %c0_3 = arith.constant 0 : index
    %4 = vector.load %arg3[%c0_2, %c0_3] : memref<1x128xi32, #tpu.memory_space<vmem>>, vector<1x128xi32>
    %5 = vector.broadcast %3 : vector<128x1xi32> to vector<128x128xi32>
    %6 = vector.broadcast %4 : vector<1x128xi32> to vector<128x128xi32>
    %7 = arith.cmpi eq, %5, %6 : vector<128x128xi32>
    %c0_4 = arith.constant 0 : index
    %c0_5 = arith.constant 0 : index
    %8 = vector.load %arg5[%c0_4, %c0_5] : memref<128x128xbf16, #tpu.memory_space<vmem>>, vector<128x128xbf16>
    %9 = arith.extf %8 : vector<128x128xbf16> to vector<128x128xf32>
    %cst = arith.constant 0.000000e+00 : f32
    %10 = vector.broadcast %cst : f32 to vector<128x128xf32>
    %11 = arith.select %7, %9, %10 : vector<128x128xi1>, vector<128x128xf32>
    %c0_6 = arith.constant 0 : index
    %c0_7 = arith.constant 0 : index
    %12 = vector.load %arg6[%c0_6, %c0_7] : memref<1x128xf32, #tpu.memory_space<vmem>>, vector<1x128xf32>
    %cst_8 = arith.constant dense<0.000000e+00> : vector<128xf32>
    %13 = vector.multi_reduction <add>, %11, %cst_8 [0] : vector<128x128xf32> to vector<128xf32>
    %14 = vector.shape_cast %13 : vector<128xf32> to vector<1x128xf32>
    %15 = arith.addf %12, %14 : vector<1x128xf32>
    %c0_9 = arith.constant 0 : index
    %c0_10 = arith.constant 0 : index
    %16 = vector.load %arg6[%c0_9, %c0_10] : memref<1x128xf32, #tpu.memory_space<vmem>>, vector<1x128xf32>
    tpu.vector_store %arg6[%c0_9, %c0_10], %15 {strides = array<i32>} : memref<1x128xf32, #tpu.memory_space<vmem>>, vector<1x128xf32>,
    return
  }
  func.func @transform_0(%arg0: i32, %arg1: i32) -> (i32, i32) {
    %c0_i32 = arith.constant 0 : i32
    %c0_i32_0 = arith.constant 0 : i32
    return %arg1, %c0_i32 : i32, i32
  }
  func.func @transform_1(%arg0: i32, %arg1: i32) -> (i32, i32) {
    %c0_i32 = arith.constant 0 : i32
    %c0_i32_0 = arith.constant 0 : i32
    return %c0_i32, %arg0 : i32, i32
  }
  func.func @transform_2(%arg0: i32, %arg1: i32) -> (i32, i32) {
    %c0_i32 = arith.constant 0 : i32
    %c0_i32_0 = arith.constant 0 : i32
    return %c0_i32, %arg0 : i32, i32
  }
  func.func @transform_3(%arg0: i32, %arg1: i32) -> (i32, i32) {
    %c0_i32 = arith.constant 0 : i32
    return %arg1, %arg0 : i32, i32
  }
  func.func @transform_4(%arg0: i32, %arg1: i32) -> (i32, i32) {
    %c0_i32 = arith.constant 0 : i32
    %c0_i32_0 = arith.constant 0 : i32
    return %c0_i32, %arg0 : i32, i32
  }
}

</mosaic_0001>

<llo_original>
// kernel: tpu_custom_call.1
$region0: #{tpu_custom_call.1}
  #allocation0 [shape = 'u32[]', space=smem, size = 0x4, offset = 0x4, fixed_abs, tag = 'smem constant byte address 0x4 - core index']
  #allocation1 [shape = 'u32[72,128]{1,0:T(1,128)}', space=vmem, size = 0x9000, scoped, tag = 'internal scratch']
  %s0 = inlined_call_operand.vmem [shape: s32[128,1], index: 0, kind: input, shape index: {}]
  %s1 = inlined_call_operand.vmem [shape: s32[1,128], index: 1, kind: input, shape index: {}]
  %s2 = inlined_call_operand.vmem [shape: f32[1,128], index: 2, kind: input, shape index: {}]
  %s3 = inlined_call_operand.vmem [shape: bf16[128,128], index: 3, kind: input, shape index: {}]
  %s4 = inlined_call_operand.hbm [shape: f32[1,128], index: 4, kind: output, shape index: {}]
  %s5 = sld [smem:[#allocation0]]
  $region30: #{tpu_custom_call.1} parent=0
    _
  %s7 = ssub.s32 1, %s5
  %s8 = scalar_select 0, %s7, %s5
  $region1: #{tpu_custom_call.1} parent=0
    #allocation2 [shape = 'u8[512]{0}', space=vmem, size = 0x400, scoped, tag = 'output window, operand 0, single buffered']
    #allocation3 [shape = 's32[1]{0}', space=sflag, size = 0x4, scoped, tag = 'scoped memory for tpu_custom_call.1']
    %9 = vsyncpa [#allocation3], 0
    // Predicated region
    $region2: #{tpu_custom_call.1} parent=1 // pred_check
      _
    $region3: #{tpu_custom_call.1} parent=1 // pred_check_branch
      %11 = sbr.rel (0) target = $region5
    $region4: #{tpu_custom_call.1} parent=1 // pred_region
      _
    $region5: #{tpu_custom_call.1} parent=1 // pred_fallthru
      _
    // Predicated region
    $region6: #{tpu_custom_call.1} parent=1 // pred_check
      _
    $region7: #{tpu_custom_call.1} parent=1 // pred_check_branch
      %13 = sbr.rel (0) target = $region9
    $region8: #{tpu_custom_call.1} parent=1 // pred_region
      _
    $region9: #{tpu_custom_call.1} parent=1 // pred_fallthru
      _
    // Predicated region
    $region10: #{tpu_custom_call.1} parent=1 // pred_check
      _
    $region11: #{tpu_custom_call.1} parent=1 // pred_check_branch
      %15 = sbr.rel (0) target = $region13
    $region12: #{tpu_custom_call.1} parent=1 // pred_region
      _
    $region13: #{tpu_custom_call.1} parent=1 // pred_fallthru
      _
    // Predicated region
    $region14: #{tpu_custom_call.1} parent=1 // pred_check
      _
    $region15: #{tpu_custom_call.1} parent=1 // pred_check_branch
      %17 = sbr.rel (0) target = $region17
    $region16: #{tpu_custom_call.1} parent=1 // pred_region
      _
    $region17: #{tpu_custom_call.1} parent=1 // pred_fallthru
      _
    %p18 = scmp.eq.s32.totalorder 0, 0
    // Predicated region
    $region18: #{tpu_custom_call.1} parent=1 // pred_check
      %p19 = pneg %p18
    $region19: #{tpu_custom_call.1} parent=1 // pred_check_branch
      %21 = sbr.rel (%p19) target = $region21
    $region20: #{tpu_custom_call.1} parent=1 // pred_region
      %v22 = vld [vmem:[%s2] sm:$0x1]
      %23 = vst [vmem:[#allocation2] sm:$0x1] %v22
    $region21: #{tpu_custom_call.1} parent=1 // pred_fallthru
      _
    %v24 = vld [vmem:[%s0] sm:$0xff]
    %v25 = vld [vmem:[%s0 + $0x8] sm:$0xff]
    %v26 = vld [vmem:[%s0 + $0x10] sm:$0xff]
    %v27 = vld [vmem:[%s0 + $0x18] sm:$0xff]
    %v28 = vld [vmem:[%s0 + $0x20] sm:$0xff]
    %v29 = vld [vmem:[%s0 + $0x28] sm:$0xff]
    %v30 = vld [vmem:[%s0 + $0x30] sm:$0xff]
    %v31 = vld [vmem:[%s0 + $0x38] sm:$0xff]
    %v32 = vld [vmem:[%s0 + $0x40] sm:$0xff]
    %v33 = vld [vmem:[%s0 + $0x48] sm:$0xff]
    %v34 = vld [vmem:[%s0 + $0x50] sm:$0xff]
    %v35 = vld [vmem:[%s0 + $0x58] sm:$0xff]
    %v36 = vld [vmem:[%s0 + $0x60] sm:$0xff]
    %v37 = vld [vmem:[%s0 + $0x68] sm:$0xff]
    %v38 = vld [vmem:[%s0 + $0x70] sm:$0xff]
    %v39 = vld [vmem:[%s0 + $0x78] sm:$0xff]
    %v40 = vld [vmem:[%s1] sm:$0x1]
    %41 = vset.pattern.permute.xlu0 0
    %42 = vperm.xlu0 %41, %v24
    %v43 = vpop.permute.xlu0 %42
    %44 = vset.pattern.permute.xlu0 0
    %45 = vperm.xlu0 %44, %v25
    %v46 = vpop.permute.xlu0 %45
    %47 = vset.pattern.permute.xlu0 0
    %48 = vperm.xlu0 %47, %v26
    %v49 = vpop.permute.xlu0 %48
    %50 = vset.pattern.permute.xlu0 0
    %51 = vperm.xlu0 %50, %v27
    %v52 = vpop.permute.xlu0 %51
    %53 = vset.pattern.permute.xlu0 0
    %54 = vperm.xlu0 %53, %v28
    %v55 = vpop.permute.xlu0 %54
    %56 = vset.pattern.permute.xlu0 0
    %57 = vperm.xlu0 %56, %v29
    %v58 = vpop.permute.xlu0 %57
    %59 = vset.pattern.permute.xlu0 0
    %60 = vperm.xlu0 %59, %v30
    %v61 = vpop.permute.xlu0 %60
    %62 = vset.pattern.permute.xlu0 0
    %63 = vperm.xlu0 %62, %v31
    %v64 = vpop.permute.xlu0 %63
    %65 = vset.pattern.permute.xlu0 0
    %66 = vperm.xlu0 %65, %v32
    %v67 = vpop.permute.xlu0 %66
    %68 = vset.pattern.permute.xlu0 0
    %69 = vperm.xlu0 %68, %v33
    %v70 = vpop.permute.xlu0 %69
    %71 = vset.pattern.permute.xlu0 0
    %72 = vperm.xlu0 %71, %v34
    %v73 = vpop.permute.xlu0 %72
    %74 = vset.pattern.permute.xlu0 0
    %75 = vperm.xlu0 %74, %v35
    %v76 = vpop.permute.xlu0 %75
    %77 = vset.pattern.permute.xlu0 0
    %78 = vperm.xlu0 %77, %v36
    %v79 = vpop.permute.xlu0 %78
    %80 = vset.pattern.permute.xlu0 0
    %81 = vperm.xlu0 %80, %v37
    %v82 = vpop.permute.xlu0 %81
    %83 = vset.pattern.permute.xlu0 0
    %84 = vperm.xlu0 %83, %v38
    %v85 = vpop.permute.xlu0 %84
    %86 = vset.pattern.permute.xlu0 0
    %87 = vperm.xlu0 %86, %v39
    %v88 = vpop.permute.xlu0 %87
    %v89 = vperm.slane %v40, 0
    %vm90 = vcmp.eq.s32.totalorder %v43, %v89
    %vm91 = vcmp.eq.s32.totalorder %v46, %v89
    %vm92 = vcmp.eq.s32.totalorder %v49, %v89
    %vm93 = vcmp.eq.s32.totalorder %v52, %v89
    %vm94 = vcmp.eq.s32.totalorder %v55, %v89
    %vm95 = vcmp.eq.s32.totalorder %v58, %v89
    %vm96 = vcmp.eq.s32.totalorder %v61, %v89
    %vm97 = vcmp.eq.s32.totalorder %v64, %v89
    %vm98 = vcmp.eq.s32.totalorder %v67, %v89
    %vm99 = vcmp.eq.s32.totalorder %v70, %v89
    %vm100 = vcmp.eq.s32.totalorder %v73, %v89
    %vm101 = vcmp.eq.s32.totalorder %v76, %v89
    %vm102 = vcmp.eq.s32.totalorder %v79, %v89
    %vm103 = vcmp.eq.s32.totalorder %v82, %v89
    %vm104 = vcmp.eq.s32.totalorder %v85, %v89
    %vm105 = vcmp.eq.s32.totalorder %v88, %v89
    %v106 = vld [vmem:[%s3] sm:$0xf]
    %v107 = vld [vmem:[%s3 + $0x4] sm:$0xf]
    %v108 = vld [vmem:[%s3 + $0x8] sm:$0xf]
    %v109 = vld [vmem:[%s3 + $0xc] sm:$0xf]
    %v110 = vld [vmem:[%s3 + $0x10] sm:$0xf]
    %v111 = vld [vmem:[%s3 + $0x14] sm:$0xf]
    %v112 = vld [vmem:[%s3 + $0x18] sm:$0xf]
    %v113 = vld [vmem:[%s3 + $0x1c] sm:$0xf]
    %v114 = vld [vmem:[%s3 + $0x20] sm:$0xf]
    %v115 = vld [vmem:[%s3 + $0x24] sm:$0xf]
    %v116 = vld [vmem:[%s3 + $0x28] sm:$0xf]
    %v117 = vld [vmem:[%s3 + $0x2c] sm:$0xf]
    %v118 = vld [vmem:[%s3 + $0x30] sm:$0xf]
    %v119 = vld [vmem:[%s3 + $0x34] sm:$0xf]
    %v120 = vld [vmem:[%s3 + $0x38] sm:$0xf]
    %v121 = vld [vmem:[%s3 + $0x3c] sm:$0xf]
    %v122 = vunpack.c.l.bf16 %v106
    %v123 = vunpack.c.l.bf16 %v107
    %v124 = vunpack.c.l.bf16 %v108
    %v125 = vunpack.c.l.bf16 %v109
    %v126 = vunpack.c.l.bf16 %v110
    %v127 = vunpack.c.l.bf16 %v111
    %v128 = vunpack.c.l.bf16 %v112
    %v129 = vunpack.c.l.bf16 %v113
    %v130 = vunpack.c.l.bf16 %v114
    %v131 = vunpack.c.l.bf16 %v115
    %v132 = vunpack.c.l.bf16 %v116
    %v133 = vunpack.c.l.bf16 %v117
    %v134 = vunpack.c.l.bf16 %v118
    %v135 = vunpack.c.l.bf16 %v119
    %v136 = vunpack.c.l.bf16 %v120
    %v137 = vunpack.c.l.bf16 %v121
    %v138 = vsel %vm90, %v122, 0.0
    %v139 = vsel %vm91, %v123, 0.0
    %v140 = vsel %vm92, %v124, 0.0
    %v141 = vsel %vm93, %v125, 0.0
    %v142 = vsel %vm94, %v126, 0.0
    %v143 = vsel %vm95, %v127, 0.0
    %v144 = vsel %vm96, %v128, 0.0
    %v145 = vsel %vm97, %v129, 0.0
    %v146 = vsel %vm98, %v130, 0.0
    %v147 = vsel %vm99, %v131, 0.0
    %v148 = vsel %vm100, %v132, 0.0
    %v149 = vsel %vm101, %v133, 0.0
    %v150 = vsel %vm102, %v134, 0.0
    %v151 = vsel %vm103, %v135, 0.0
    %v152 = vsel %vm104, %v136, 0.0
    %v153 = vsel %vm105, %v137, 0.0
    %v154 = vld [vmem:[#allocation2] sm:$0x1]
    %v155 = vadd.f32 %v138, %v139
    %v156 = vadd.f32 %v155, %v140
    %v157 = vadd.f32 %v156, %v141
    %v158 = vadd.f32 %v157, %v142
    %v159 = vadd.f32 %v158, %v143
    %v160 = vadd.f32 %v159, %v144
    %v161 = vadd.f32 %v160, %v145
    %v162 = vadd.f32 %v161, %v146
    %v163 = vadd.f32 %v162, %v147
    %v164 = vadd.f32 %v163, %v148
    %v165 = vadd.f32 %v164, %v149
    %v166 = vadd.f32 %v165, %v150
    %v167 = vadd.f32 %v166, %v151
    %v168 = vadd.f32 %v167, %v152
    %v169 = vadd.f32 %v168, %v153
    %v170 = vrot.slane %v169, 4
    %v171 = vadd.f32 %v169, %v170
    %v172 = vrot.slane %v171, 2
    %v173 = vadd.f32 %v171, %v172
    %v174 = vrot.slane %v173, 1
    %v175 = vadd.f32 %v173, %v174
    %v176 = vadd.f32 %v154, %v175
    %177 = vst [vmem:[#allocation2] sm:$0x1] %v176
    // Predicated region
    $region22: #{tpu_custom_call.1} parent=1 // pred_check
      _
    $region23: #{tpu_custom_call.1} parent=1 // pred_check_branch
      %179 = sbr.rel (0) target = $region25
    $region24: #{tpu_custom_call.1} parent=1 // pred_region
      %181 = vsyncadd [#allocation3], 0
      %s183 = sshll.u32 [#allocation2], 4
      %s184 = int_to_ptr.vmem [resolvable:$true] %s183
      %s185 = sshll.u32 %s4, 4
      %s186 = int_to_ptr.hbm [resolvable:$true] %s185
      %188 = dma.vmem_to_hbm [thread:$0]  %s184, 16, %s186, [#allocation3]
    $region25: #{tpu_custom_call.1} parent=1 // pred_fallthru
      _
    // Predicated region
    $region26: #{tpu_custom_call.1} parent=1 // pred_check
      _
    $region27: #{tpu_custom_call.1} parent=1 // pred_check_branch
      %190 = sbr.rel (0) target = $region29
    $region28: #{tpu_custom_call.1} parent=1 // pred_region
      %192 = dma.done [#allocation3], 16
    $region29: #{tpu_custom_call.1} parent=1 // pred_fallthru
      _
    %193 = vsyncpa [#allocation3], 1

</llo_original>
